<compile_context>
chip_gen: v6e
topology: v6e:2x2x1
jax: 0.10.0
libtpu: 0.0.40
codegen_flags: <defaults>
</compile_context>

<pallas_src>
import math
from functools import partial

import jax
import jax.numpy as jnp
from jax import lax
from jax.experimental import pallas as pl
from jax.experimental.pallas import tpu as pltpu

LN_EPS = 1e-5  # torch nn.LayerNorm default eps


# ----------------------------- in-kernel helpers -----------------------------

def _erf(x):
    # Abramowitz & Stegun 7.1.26 rational approximation (|err| < 1.5e-7).
    a1, a2, a3, a4, a5 = (0.254829592, -0.284496736, 1.421413741,
                          -1.453152027, 1.061405429)
    p = 0.3275911
    s = jnp.where(x >= 0.0, 1.0, -1.0)
    ax = jnp.abs(x)
    t = pl.reciprocal(1.0 + p * ax, approx=True)   # EUP divide (free slot)
    poly = ((((a5 * t + a4) * t + a3) * t + a2) * t + a1) * t
    return s * (1.0 - poly * jnp.exp(-ax * ax))


def _gelu_exact(x):
    # matches torch nn.GELU() (erf form)
    return 0.5 * x * (1.0 + _erf(x * 0.7071067811865476))


# --------------------------------- kernel ------------------------------------

def _feed_forward_kernel(x_ref, g_ref, b_ref, w1_ref, b1_ref, w2_ref, b2_ref,
                         o_ref, xn_ref, acc_ref):
    # Grid: (row tiles [parallel], hidden chunks [arbitrary / reduction]).
    j = pl.program_id(1)

    @pl.when(j == 0)
    def _():
        # LayerNorm once per row tile; stats in f32 even for bf16 inputs.
        x = x_ref[...].astype(jnp.float32)                       # (tm, D)
        mu = jnp.mean(x, axis=-1, keepdims=True)
        var = jnp.mean(jnp.square(x - mu), axis=-1, keepdims=True)
        xn = (x - mu) * lax.rsqrt(var + LN_EPS) * g_ref[...] + b_ref[...]
        xn_ref[...] = xn.astype(xn_ref.dtype)                    # cache (MXU dtype)
        acc_ref[...] = jnp.zeros_like(acc_ref)

    # Hidden-chunk matmuls: bf16 in -> f32 accumulate.
    h = jnp.dot(xn_ref[...], w1_ref[...],
                preferred_element_type=jnp.float32) + b1_ref[...]   # (tm, tH) f32
    h = _gelu_exact(h)
    w2 = w2_ref[...]                                                # (tH, D)
    acc_ref[...] += jnp.dot(h.astype(w2.dtype), w2,
                            preferred_element_type=jnp.float32)

    @pl.when(j == pl.num_programs(1) - 1)
    def _():
        o_ref[...] = (acc_ref[...] + b2_ref[...]).astype(o_ref.dtype)


# ------------------------------ kernel wrapper --------------------------------

def _pick_chunk(total, target, align):
    """Largest multiple of `align` that divides `total` and is <= target."""
    if total <= target:
        return total
    c = (target // align) * align
    while c >= align:
        if total % c == 0:
            return c
        c -= align
    return total  # no aligned divisor: take the whole axis (still correct)


def feed_forward(x, params, *, block_rows=256, block_hidden=512):
    """Apply the fused FeedForward kernel to x of shape (..., dim)."""
    *lead, D = x.shape
    M = int(math.prod(lead)) if lead else 1
    x2d = x.reshape(M, D)

    H = params["w1"].shape[1]
    wdtype = params["w1"].dtype
    wbytes = jnp.dtype(wdtype).itemsize

    # Row tile: whole M if it fits in one tile, else MXU-friendly block_rows.
    # No wrapper-side padding: the ragged last tile is masked by Pallas.
    tm = M if M <= block_rows else block_rows
    # Hidden chunk must divide H exactly (padded K columns would pollute acc).
    tH = _pick_chunk(H, block_hidden, 128)
    grid = (pl.cdiv(M, tm), H // tH)

    # Explicit scoped-VMEM budget from actual tile sizes (double buffers included),
    # clamped to 64 MiB so it is valid on v7x as well as v5e/v6e.
    est = (2 * tm * D * 4             # x tile (2 pipeline buffers)
           + 2 * tm * D * 4           # out tile
           + 2 * D * tH * wbytes      # W1 chunk
           + 2 * tH * D * wbytes      # W2 chunk
           + 2 * (3 * D + tH) * 4     # ln_g, ln_b, b2, b1
           + tm * D * (wbytes + 4)    # xn cache + f32 accumulator scratch
           + 2 * tm * tH * 4)         # (tm, tH) intermediate + temp headroom
    vmem_limit = min(64 << 20, max(32 << 20, int(est * 1.5)))

    out = pl.pallas_call(
        _feed_forward_kernel,
        out_shape=jax.ShapeDtypeStruct((M, D), x.dtype),
        grid=grid,
        in_specs=[
            pl.BlockSpec((tm, D), lambda i, j: (i, 0)),   # x rows
            pl.BlockSpec((1, D), lambda i, j: (0, 0)),    # LN gamma
            pl.BlockSpec((1, D), lambda i, j: (0, 0)),    # LN beta
            pl.BlockSpec((D, tH), lambda i, j: (0, j)),   # W1 hidden-chunk
            pl.BlockSpec((1, tH), lambda i, j: (0, j)),   # b1 hidden-chunk
            pl.BlockSpec((tH, D), lambda i, j: (j, 0)),   # W2 hidden-chunk
            pl.BlockSpec((1, D), lambda i, j: (0, 0)),    # b2
        ],
        out_specs=pl.BlockSpec((tm, D), lambda i, j: (i, 0)),
        scratch_shapes=[
            pltpu.VMEM((tm, D), wdtype),       # cached LayerNorm output (MXU dtype)
            pltpu.VMEM((tm, D), jnp.float32),  # f32 accumulator across H chunks
        ],
        compiler_params=pltpu.CompilerParams(
            dimension_semantics=("parallel", "arbitrary"),
            vmem_limit_bytes=vmem_limit,
        ),
    )(x2d, params["ln_g"], params["ln_b"],
      params["w1"], params["b1"], params["w2"], params["b2"])

    return out.reshape(*lead, D)


# ------------------------------ parameter setup --------------------------------

def init_feed_forward_params(key, dim, hidden_dim, weights_dtype=jnp.bfloat16):
    """torch defaults: LayerNorm(gamma=1, beta=0), nn.Linear uniform init.

    weights_dtype defaults to bf16 (native MXU rate); pass jnp.float32 for
    bit-closer parity with an f32 torch reference.
    """
    def dense(k, fan_in, fan_out):
        kw, kb = jax.random.split(k)
        lim = 1.0 / math.sqrt(fan_in)
        w = jax.random.uniform(kw, (fan_in, fan_out), jnp.float32, -lim, lim)
        b = jax.random.uniform(kb, (1, fan_out), jnp.float32, -lim, lim)
        return w.astype(weights_dtype), b

    k1, k2 = jax.random.split(key)
    w1, b1 = dense(k1, dim, hidden_dim)
    w2, b2 = dense(k2, hidden_dim, dim)
    return dict(
        ln_g=jnp.ones((1, dim), jnp.float32),
        ln_b=jnp.zeros((1, dim), jnp.float32),
        w1=w1, b1=b1, w2=w2, b2=b2,
    )


# ------------------------------ pure-JAX reference -----------------------------

def feed_forward_ref(x, params):
    x = x.astype(jnp.float32)
    mu = jnp.mean(x, axis=-1, keepdims=True)
    var = jnp.mean(jnp.square(x - mu), axis=-1, keepdims=True)
    xn = (x - mu) / jnp.sqrt(var + LN_EPS) * params["ln_g"] + params["ln_b"]
    h = xn @ params["w1"].astype(jnp.float32) + params["b1"]
    h = jax.nn.gelu(h, approximate=False)
    return h @ params["w2"].astype(jnp.float32) + params["b2"]


# ----------------------------------- main --------------------------------------

if __name__ == "__main__":
    key = jax.random.PRNGKey(0)
    k1, k2, k3, k4 = jax.random.split(key, 4)

    # TODO(synk): nn.Dropout(p=0.0) is the identity, so it is omitted; p>0 would
    # need pltpu.prng_* based masking.

    # Case 1: single tile (grid = (1, 1)), default bf16-weight MXU path.
    batch, seq, dim, hidden_dim = 2, 8, 128, 256
    x = jax.random.normal(k1, (batch, seq, dim), jnp.float32)
    params = init_feed_forward_params(k2, dim, hidden_dim)
    y = jax.jit(feed_forward)(x, params)
    jax.block_until_ready(y)
    y_ref = feed_forward_ref(x, params)
    assert y.shape == (batch, seq, dim)
    assert bool(jnp.all(jnp.isfinite(y)))
    err1 = float(jnp.max(jnp.abs(y - y_ref)))
    assert err1 < 2e-2, f"case1 max abs err vs reference: {err1}"

    # Case 2: multi-tile grid with a ragged last row tile and 2 hidden chunks
    # (exercises the parallel row axis, H-chunk accumulation and tail masking).
    batch, seq, dim, hidden_dim = 2, 20, 128, 512      # M = 40, tm = 16 -> ragged
    x = jax.random.normal(k3, (batch, seq, dim), jnp.float32)
    params = init_feed_forward_params(k4, dim, hidden_dim)
    fwd2 = jax.jit(partial(feed_forward, block_rows=16, block_hidden=256))
    y = fwd2(x, params)
    jax.block_until_ready(y)
    y_ref = feed_forward_ref(x, params)
    assert y.shape == (batch, seq, dim)
    assert bool(jnp.all(jnp.isfinite(y)))
    err2 = float(jnp.max(jnp.abs(y - y_ref)))
    assert err2 < 2e-2, f"case2 max abs err vs reference: {err2}"

    print("KERNEL_OK")
</pallas_src>

<mosaic_0001>
module attributes {stable_mosaic.version = 11 : i64} {
  func.func @_feed_forward_kernel(%arg0: i32, %arg1: i32, %arg2: memref<16x128xf32, #tpu.memory_space<vmem>>, %arg3: memref<1x128xf32, #tpu.memory_space<vmem>>, %arg4: memref<1x128xf32, #tpu.memory_space<vmem>>, %arg5: memref<128x256xbf16, #tpu.memory_space<vmem>>, %arg6: memref<1x256xf32, #tpu.memory_space<vmem>>, %arg7: memref<256x128xbf16, #tpu.memory_space<vmem>>, %arg8: memref<1x128xf32, #tpu.memory_space<vmem>>, %arg9: memref<16x128xf32, #tpu.memory_space<vmem>>, %arg10: memref<16x128xbf16, #tpu.memory_space<vmem>>, %arg11: memref<16x128xf32, #tpu.memory_space<vmem>>) attributes {dimension_semantics = [#tpu.dimension_semantics<parallel>, #tpu.dimension_semantics<arbitrary>], iteration_bounds = array<i64: 1, 1>, scalar_prefetch = 0 : i64, scratch_operands = 2 : i64, tpu.core_type = #tpu.core_type<tc>, window_params = [{transform_indices = @transform_0, window_bounds = array<i64: 16, 128>}, {pipeline_mode = #tpu.pipeline_mode<synchronous>, transform_indices = @transform_1, window_bounds = array<i64: 1, 128>}, {pipeline_mode = #tpu.pipeline_mode<synchronous>, transform_indices = @transform_2, window_bounds = array<i64: 1, 128>}, {transform_indices = @transform_3, window_bounds = array<i64: 128, 256>}, {transform_indices = @transform_4, window_bounds = array<i64: 1, 256>}, {transform_indices = @transform_5, window_bounds = array<i64: 256, 128>}, {pipeline_mode = #tpu.pipeline_mode<synchronous>, transform_indices = @transform_6, window_bounds = array<i64: 1, 128>}, {transform_indices = @transform_7, window_bounds = array<i64: 16, 128>}]} {
    %c0_i32 = arith.constant 0 : i32
    %0 = arith.cmpi eq, %arg1, %c0_i32 : i32
    %1 = arith.extui %0 : i1 to i32
    %c0_i32_0 = arith.constant 0 : i32
    %2 = arith.cmpi ne, %1, %c0_i32_0 : i32
    scf.if %2 {
      %c0_30 = arith.constant 0 : index
      %c0_31 = arith.constant 0 : index
      %58 = vector.load %arg2[%c0_30, %c0_31] : memref<16x128xf32, #tpu.memory_space<vmem>>, vector<16x128xf32>
      %cst_32 = arith.constant dense<0.000000e+00> : vector<16xf32>
      %59 = vector.multi_reduction <add>, %58, %cst_32 [1] : vector<16x128xf32> to vector<16xf32>
      %60 = vector.shape_cast %59 : vector<16xf32> to vector<16x1xf32>
      %cst_33 = arith.constant 1.280000e+02 : f32
      %61 = vector.broadcast %cst_33 : f32 to vector<16x1xf32>
      %62 = arith.divf %60, %61 : vector<16x1xf32>
      %63 = vector.broadcast %62 : vector<16x1xf32> to vector<16x128xf32>
      %64 = arith.subf %58, %63 : vector<16x128xf32>
      %65 = arith.mulf %64, %64 : vector<16x128xf32>
      %cst_34 = arith.constant dense<0.000000e+00> : vector<16xf32>
      %66 = vector.multi_reduction <add>, %65, %cst_34 [1] : vector<16x128xf32> to vector<16xf32>
      %67 = vector.shape_cast %66 : vector<16xf32> to vector<16x1xf32>
      %cst_35 = arith.constant 1.280000e+02 : f32
      %68 = vector.broadcast %cst_35 : f32 to vector<16x1xf32>
      %69 = arith.divf %67, %68 : vector<16x1xf32>
      %70 = vector.broadcast %62 : vector<16x1xf32> to vector<16x128xf32>
      %71 = arith.subf %58, %70 : vector<16x128xf32>
      %cst_36 = arith.constant 9.99999974E-6 : f32
      %72 = vector.broadcast %cst_36 : f32 to vector<16x1xf32>
      %73 = arith.addf %69, %72 : vector<16x1xf32>
      %74 = math.rsqrt %73 : vector<16x1xf32>
      %75 = vector.broadcast %74 : vector<16x1xf32> to vector<16x128xf32>
      %76 = arith.mulf %71, %75 : vector<16x128xf32>
      %c0_37 = arith.constant 0 : index
      %c0_38 = arith.constant 0 : index
      %77 = vector.load %arg3[%c0_37, %c0_38] : memref<1x128xf32, #tpu.memory_space<vmem>>, vector<1x128xf32>
      %78 = vector.broadcast %77 : vector<1x128xf32> to vector<16x128xf32>
      %79 = arith.mulf %76, %78 : vector<16x128xf32>
      %c0_39 = arith.constant 0 : index
      %c0_40 = arith.constant 0 : index
      %80 = vector.load %arg4[%c0_39, %c0_40] : memref<1x128xf32, #tpu.memory_space<vmem>>, vector<1x128xf32>
      %81 = vector.broadcast %80 : vector<1x128xf32> to vector<16x128xf32>
      %82 = arith.addf %79, %81 : vector<16x128xf32>
      %83 = arith.truncf %82 : vector<16x128xf32> to vector<16x128xbf16>
      %c0_41 = arith.constant 0 : index
      %c0_42 = arith.constant 0 : index
      %84 = vector.load %arg10[%c0_41, %c0_42] : memref<16x128xbf16, #tpu.memory_space<vmem>>, vector<16x128xbf16>
      tpu.vector_store %arg10[%c0_41, %c0_42], %83 {strides = array<i32>} : memref<16x128xbf16, #tpu.memory_space<vmem>>, vector<16x128xbf16>,
      %cst_43 = arith.constant 0.000000e+00 : f32
      %85 = vector.broadcast %cst_43 : f32 to vector<16x128xf32>
      %c0_44 = arith.constant 0 : index
      %c0_45 = arith.constant 0 : index
      %86 = vector.load %arg11[%c0_44, %c0_45] : memref<16x128xf32, #tpu.memory_space<vmem>>, vector<16x128xf32>
      tpu.vector_store %arg11[%c0_44, %c0_45], %85 {strides = array<i32>} : memref<16x128xf32, #tpu.memory_space<vmem>>, vector<16x128xf32>,
    } else {
    }
    %c0 = arith.constant 0 : index
    %c0_1 = arith.constant 0 : index
    %3 = vector.load %arg10[%c0, %c0_1] : memref<16x128xbf16, #tpu.memory_space<vmem>>, vector<16x128xbf16>
    %c0_2 = arith.constant 0 : index
    %c0_3 = arith.constant 0 : index
    %4 = vector.load %arg5[%c0_2, %c0_3] : memref<128x256xbf16, #tpu.memory_space<vmem>>, vector<128x256xbf16>
    %cst = arith.constant dense<0.000000e+00> : vector<16x256xf32>
    %5 = tpu.matmul %3, %4, %cst {dimension_numbers = #tpu.dot_dimension_numbers<[1], [0], [0], [1], [0, 0, 1, 1], [], []>} : vector<16x128xbf16>, vector<128x256xbf16>, vector<16x256xf32> -> vector<16x256xf32>
    %c0_4 = arith.constant 0 : index
    %c0_5 = arith.constant 0 : index
    %6 = vector.load %arg6[%c0_4, %c0_5] : memref<1x256xf32, #tpu.memory_space<vmem>>, vector<1x256xf32>
    %7 = vector.broadcast %6 : vector<1x256xf32> to vector<16x256xf32>
    %8 = arith.addf %5, %7 : vector<16x256xf32>
    %cst_6 = arith.constant 5.000000e-01 : f32
    %9 = vector.broadcast %cst_6 : f32 to vector<16x256xf32>
    %10 = arith.mulf %9, %8 : vector<16x256xf32>
    %cst_7 = arith.constant 0.707106769 : f32
    %11 = vector.broadcast %cst_7 : f32 to vector<16x256xf32>
    %12 = arith.mulf %8, %11 : vector<16x256xf32>
    %cst_8 = arith.constant 0.000000e+00 : f32
    %13 = vector.broadcast %cst_8 : f32 to vector<16x256xf32>
    %14 = arith.cmpf oge, %12, %13 : vector<16x256xf32>
    %cst_9 = arith.constant 1.000000e+00 : f32
    %cst_10 = arith.constant -1.000000e+00 : f32
    %15 = vector.broadcast %cst_9 : f32 to vector<16x256xf32>
    %16 = vector.broadcast %cst_10 : f32 to vector<16x256xf32>
    %17 = arith.select %14, %15, %16 : vector<16x256xi1>, vector<16x256xf32>
    %18 = math.absf %12 : vector<16x256xf32>
    %cst_11 = arith.constant 0.327591091 : f32
    %19 = vector.broadcast %cst_11 : f32 to vector<16x256xf32>
    %20 = arith.mulf %19, %18 : vector<16x256xf32>
    %cst_12 = arith.constant 1.000000e+00 : f32
    %21 = vector.broadcast %cst_12 : f32 to vector<16x256xf32>
    %22 = arith.addf %21, %20 : vector<16x256xf32>
    %23 = tpu.reciprocal %22 {approx = true} : vector<16x256xf32> -> vector<16x256xf32>
    %cst_13 = arith.constant 1.06140542 : f32
    %24 = vector.broadcast %cst_13 : f32 to vector<16x256xf32>
    %25 = arith.mulf %24, %23 : vector<16x256xf32>
    %cst_14 = arith.constant -1.45315206 : f32
    %26 = vector.broadcast %cst_14 : f32 to vector<16x256xf32>
    %27 = arith.addf %25, %26 : vector<16x256xf32>
    %28 = arith.mulf %27, %23 : vector<16x256xf32>
    %cst_15 = arith.constant 1.42141378 : f32
    %29 = vector.broadcast %cst_15 : f32 to vector<16x256xf32>
    %30 = arith.addf %28, %29 : vector<16x256xf32>
    %31 = arith.mulf %30, %23 : vector<16x256xf32>
    %cst_16 = arith.constant -0.284496725 : f32
    %32 = vector.broadcast %cst_16 : f32 to vector<16x256xf32>
    %33 = arith.addf %31, %32 : vector<16x256xf32>
    %34 = arith.mulf %33, %23 : vector<16x256xf32>
    %cst_17 = arith.constant 0.254829586 : f32
    %35 = vector.broadcast %cst_17 : f32 to vector<16x256xf32>
    %36 = arith.addf %34, %35 : vector<16x256xf32>
    %37 = arith.mulf %36, %23 : vector<16x256xf32>
    %cst_18 = arith.constant 0.000000e+00 : f32
    %38 = vector.broadcast %cst_18 : f32 to vector<16x256xf32>
    %39 = arith.subf %38, %18 : vector<16x256xf32>
    %40 = arith.mulf %39, %18 : vector<16x256xf32>
    %41 = math.exp %40 : vector<16x256xf32>
    %42 = arith.mulf %37, %41 : vector<16x256xf32>
    %cst_19 = arith.constant 1.000000e+00 : f32
    %43 = vector.broadcast %cst_19 : f32 to vector<16x256xf32>
    %44 = arith.subf %43, %42 : vector<16x256xf32>
    %45 = arith.mulf %17, %44 : vector<16x256xf32>
    %cst_20 = arith.constant 1.000000e+00 : f32
    %46 = vector.broadcast %cst_20 : f32 to vector<16x256xf32>
    %47 = arith.addf %46, %45 : vector<16x256xf32>
    %48 = arith.mulf %10, %47 : vector<16x256xf32>
    %c0_21 = arith.constant 0 : index
    %c0_22 = arith.constant 0 : index
    %49 = vector.load %arg7[%c0_21, %c0_22] : memref<256x128xbf16, #tpu.memory_space<vmem>>, vector<256x128xbf16>
    %c0_23 = arith.constant 0 : index
    %c0_24 = arith.constant 0 : index
    %50 = vector.load %arg11[%c0_23, %c0_24] : memref<16x128xf32, #tpu.memory_space<vmem>>, vector<16x128xf32>
    %51 = arith.truncf %48 : vector<16x256xf32> to vector<16x256xbf16>
    %cst_25 = arith.constant dense<0.000000e+00> : vector<16x128xf32>
    %52 = tpu.matmul %51, %49, %cst_25 {dimension_numbers = #tpu.dot_dimension_numbers<[1], [0], [0], [1], [0, 0, 1, 1], [], []>} : vector<16x256xbf16>, vector<256x128xbf16>, vector<16x128xf32> -> vector<16x128xf32>
    %53 = arith.addf %50, %52 : vector<16x128xf32>
    %c0_26 = arith.constant 0 : index
    %c0_27 = arith.constant 0 : index
    %54 = vector.load %arg11[%c0_26, %c0_27] : memref<16x128xf32, #tpu.memory_space<vmem>>, vector<16x128xf32>
    tpu.vector_store %arg11[%c0_26, %c0_27], %53 {strides = array<i32>} : memref<16x128xf32, #tpu.memory_space<vmem>>, vector<16x128xf32>,
    %c0_i32_28 = arith.constant 0 : i32
    %55 = arith.cmpi eq, %arg1, %c0_i32_28 : i32
    %56 = arith.extui %55 : i1 to i32
    %c0_i32_29 = arith.constant 0 : i32
    %57 = arith.cmpi ne, %56, %c0_i32_29 : i32
    scf.if %57 {
      %c0_30 = arith.constant 0 : index
      %c0_31 = arith.constant 0 : index
      %58 = vector.load %arg11[%c0_30, %c0_31] : memref<16x128xf32, #tpu.memory_space<vmem>>, vector<16x128xf32>
      %c0_32 = arith.constant 0 : index
      %c0_33 = arith.constant 0 : index
      %59 = vector.load %arg8[%c0_32, %c0_33] : memref<1x128xf32, #tpu.memory_space<vmem>>, vector<1x128xf32>
      %60 = vector.broadcast %59 : vector<1x128xf32> to vector<16x128xf32>
      %61 = arith.addf %58, %60 : vector<16x128xf32>
      %c0_34 = arith.constant 0 : index
      %c0_35 = arith.constant 0 : index
      %62 = vector.load %arg9[%c0_34, %c0_35] : memref<16x128xf32, #tpu.memory_space<vmem>>, vector<16x128xf32>
      tpu.vector_store %arg9[%c0_34, %c0_35], %61 {strides = array<i32>} : memref<16x128xf32, #tpu.memory_space<vmem>>, vector<16x128xf32>,
    } else {
    }
    return
  }
  func.func @transform_0(%arg0: i32, %arg1: i32) -> (i32, i32) {
    %c0_i32 = arith.constant 0 : i32
    %c0_i32_0 = arith.constant 0 : i32
    return %arg0, %c0_i32 : i32, i32
  }
  func.func @transform_1(%arg0: i32, %arg1: i32) -> (i32, i32) {
    %c0_i32 = arith.constant 0 : i32
    %c0_i32_0 = arith.constant 0 : i32
    %c0_i32_1 = arith.constant 0 : i32
    return %c0_i32, %c0_i32_0 : i32, i32
  }
  func.func @transform_2(%arg0: i32, %arg1: i32) -> (i32, i32) {
    %c0_i32 = arith.constant 0 : i32
    %c0_i32_0 = arith.constant 0 : i32
    %c0_i32_1 = arith.constant 0 : i32
    return %c0_i32, %c0_i32_0 : i32, i32
  }
  func.func @transform_3(%arg0: i32, %arg1: i32) -> (i32, i32) {
    %c0_i32 = arith.constant 0 : i32
    %c0_i32_0 = arith.constant 0 : i32
    return %c0_i32, %arg1 : i32, i32
  }
  func.func @transform_4(%arg0: i32, %arg1: i32) -> (i32, i32) {
    %c0_i32 = arith.constant 0 : i32
    %c0_i32_0 = arith.constant 0 : i32
    return %c0_i32, %arg1 : i32, i32
  }
  func.func @transform_5(%arg0: i32, %arg1: i32) -> (i32, i32) {
    %c0_i32 = arith.constant 0 : i32
    %c0_i32_0 = arith.constant 0 : i32
    return %arg1, %c0_i32 : i32, i32
  }
  func.func @transform_6(%arg0: i32, %arg1: i32) -> (i32, i32) {
    %c0_i32 = arith.constant 0 : i32
    %c0_i32_0 = arith.constant 0 : i32
    %c0_i32_1 = arith.constant 0 : i32
    return %c0_i32, %c0_i32_0 : i32, i32
  }
  func.func @transform_7(%arg0: i32, %arg1: i32) -> (i32, i32) {
    %c0_i32 = arith.constant 0 : i32
    %c0_i32_0 = arith.constant 0 : i32
    return %arg0, %c0_i32 : i32, i32
  }
}

</mosaic_0001>

<llo_original>
// kernel: feed_forward.1
$region0: #{feed_forward.1}
  #allocation0 [shape = 'u32[]', space=smem, size = 0x4, offset = 0x4, fixed_abs, tag = 'smem constant byte address 0x4 - core index']
  #allocation1 [shape = 'u32[144,128]{1,0:T(1,128)}', space=vmem, size = 0x12000, scoped, tag = 'internal scratch']
  #allocation2 [shape = 'bf16[16,128]{1,0:T(8,128)(2,1)}', space=vmem, size = 0x1000, scoped, tag = 'scratch operand']
  #allocation3 [shape = 'f32[16,128]{1,0:T(8,128)}', space=vmem, size = 0x2000, scoped, tag = 'scratch operand']
  %s0 = inlined_call_operand.hbm [shape: f32[16,128], index: 0, kind: input, shape index: {}]
  %s1 = inlined_call_operand.vmem [shape: f32[1,128], index: 1, kind: input, shape index: {}]
  %s2 = inlined_call_operand.vmem [shape: f32[1,128], index: 2, kind: input, shape index: {}]
  %s3 = inlined_call_operand.hbm [shape: bf16[128,256], index: 3, kind: input, shape index: {}]
  %s4 = inlined_call_operand.vmem [shape: f32[1,256], index: 4, kind: input, shape index: {}]
  %s5 = inlined_call_operand.hbm [shape: bf16[256,128], index: 5, kind: input, shape index: {}]
  %s6 = inlined_call_operand.vmem [shape: f32[1,128], index: 6, kind: input, shape index: {}]
  %s7 = inlined_call_operand.hbm [shape: f32[16,128], index: 7, kind: output, shape index: {}]
  %s8 = sld [smem:[#allocation0]]
  $region58: #{feed_forward.1} parent=0
    _
  %s10 = ssub.s32 1, %s8
  %s11 = scalar_select 0, %s10, %s8
  $region1: #{feed_forward.1} parent=0
    #allocation4 [shape = 'u8[8192]{0}', space=vmem, size = 0x2000, scoped, tag = 'input window, operand 0, single buffered']
    #allocation5 [shape = 's32[1]{0}', space=sflag, size = 0x4, scoped, tag = 'scoped memory for feed_forward.1']
    #allocation6 [shape = 's32[1]{0}', space=sflag, size = 0x4, scoped, tag = 'scoped memory for feed_forward.1']
    #allocation7 [shape = 'u8[65536]{0}', space=vmem, size = 0x10000, scoped, tag = 'input window, operand 3, single buffered']
    #allocation8 [shape = 's32[1]{0}', space=sflag, size = 0x4, scoped, tag = 'scoped memory for feed_forward.1']
    #allocation9 [shape = 'u8[65536]{0}', space=vmem, size = 0x10000, scoped, tag = 'input window, operand 5, single buffered']
    #allocation10 [shape = 'u8[8192]{0}', space=vmem, size = 0x2000, scoped, tag = 'output window, operand 0, single buffered']
    %12 = vsyncpa [#allocation5], 0
    %13 = vsyncpa [#allocation8], 0
    %14 = vsyncpa [#allocation6], 0
    // Predicated region
    $region2: #{feed_forward.1} parent=1 // pred_check
      _
    $region3: #{feed_forward.1} parent=1 // pred_check_branch
      %16 = sbr.rel (0) target = $region5
    $region4: #{feed_forward.1} parent=1 // pred_region
      %s18 = ssub.s32 256, 256
      %19 = vsyncadd [#allocation5], %s18
      %s20 = sshll.u32 [#allocation4], 4
      %s21 = int_to_ptr.vmem [resolvable:$true] %s20
      %26 = dma.hbm_to_vmem [thread:$0]  %s0, 256, %s21, [#allocation5], 128, 128, 8
    $region5: #{feed_forward.1} parent=1 // pred_fallthru
      _
    // Predicated region
    $region6: #{feed_forward.1} parent=1 // pred_check
      _
    $region7: #{feed_forward.1} parent=1 // pred_check_branch
      %28 = sbr.rel (0) target = $region9
    $region8: #{feed_forward.1} parent=1 // pred_region
      _
    $region9: #{feed_forward.1} parent=1 // pred_fallthru
      _
    // Predicated region
    $region10: #{feed_forward.1} parent=1 // pred_check
      _
    $region11: #{feed_forward.1} parent=1 // pred_check_branch
      %30 = sbr.rel (0) target = $region13
    $region12: #{feed_forward.1} parent=1 // pred_region
      _
    $region13: #{feed_forward.1} parent=1 // pred_fallthru
      _
    // Predicated region
    $region14: #{feed_forward.1} parent=1 // pred_check
      _
    $region15: #{feed_forward.1} parent=1 // pred_check_branch
      %32 = sbr.rel (0) target = $region17
    $region16: #{feed_forward.1} parent=1 // pred_region
      %s34 = ssub.s32 2048, 2048
      %35 = vsyncadd [#allocation8], %s34
      %s36 = sshll.u32 [#allocation7], 4
      %s37 = int_to_ptr.vmem [resolvable:$true] %s36
      %42 = dma.hbm_to_vmem [thread:$0]  %s3, 2048, %s37, [#allocation8], 128, 128, 8
    $region17: #{feed_forward.1} parent=1 // pred_fallthru
      _
    // Predicated region
    $region18: #{feed_forward.1} parent=1 // pred_check
      _
    $region19: #{feed_forward.1} parent=1 // pred_check_branch
      %44 = sbr.rel (0) target = $region21
    $region20: #{feed_forward.1} parent=1 // pred_region
      _
    $region21: #{feed_forward.1} parent=1 // pred_fallthru
      _
    // Predicated region
    $region22: #{feed_forward.1} parent=1 // pred_check
      _
    $region23: #{feed_forward.1} parent=1 // pred_check_branch
      %46 = sbr.rel (0) target = $region25
    $region24: #{feed_forward.1} parent=1 // pred_region
      %s48 = ssub.s32 2048, 2048
      %49 = vsyncadd [#allocation8], %s48
      %s50 = sshll.u32 [#allocation9], 4
      %s51 = int_to_ptr.vmem [resolvable:$true] %s50
      %56 = dma.hbm_to_vmem [thread:$0]  %s5, 2048, %s51, [#allocation8], 64, 64, 4
    $region25: #{feed_forward.1} parent=1 // pred_fallthru
      _
    // Predicated region
    $region26: #{feed_forward.1} parent=1 // pred_check
      _
    $region27: #{feed_forward.1} parent=1 // pred_check_branch
      %58 = sbr.rel (0) target = $region29
    $region28: #{feed_forward.1} parent=1 // pred_region
      _
    $region29: #{feed_forward.1} parent=1 // pred_fallthru
      _
    // Predicated region
    $region30: #{feed_forward.1} parent=1 // pred_check
      _
    $region31: #{feed_forward.1} parent=1 // pred_check_branch
      %60 = sbr.rel (0) target = $region33
    $region32: #{feed_forward.1} parent=1 // pred_region
      %61 = dma.done [#allocation5], 256
    $region33: #{feed_forward.1} parent=1 // pred_fallthru
      _
    // Predicated region
    $region34: #{feed_forward.1} parent=1 // pred_check
      _
    $region35: #{feed_forward.1} parent=1 // pred_check_branch
      %63 = sbr.rel (0) target = $region37
    $region36: #{feed_forward.1} parent=1 // pred_region
      %64 = dma.done [#allocation8], 2048
    $region37: #{feed_forward.1} parent=1 // pred_fallthru
      _
    // Predicated region
    $region38: #{feed_forward.1} parent=1 // pred_check
      _
    $region39: #{feed_forward.1} parent=1 // pred_check_branch
      %66 = sbr.rel (0) target = $region41
    $region40: #{feed_forward.1} parent=1 // pred_region
      %67 = dma.done [#allocation8], 2048
    $region41: #{feed_forward.1} parent=1 // pred_fallthru
      _
    %p69 = scmp.eq.s32.totalorder 0, 0
    // Predicated region
    $region42: #{feed_forward.1} parent=1 // pred_check
      %p70 = pneg %p69
    $region43: #{feed_forward.1} parent=1 // pred_check_branch
      %72 = sbr.rel (%p70) target = $region45
    $region44: #{feed_forward.1} parent=1 // pred_region
      %v73 = vld [vmem:[#allocation4] sm:$0xff]
      %v74 = vld [vmem:[#allocation4 + $0x8] sm:$0xff]
      %75 = vadd.xlane.f32.xlu0 %v73
      %v76 = vpop.xlane.xlu0 %75
      %77 = vadd.xlane.f32.xlu0 %v74
      %v78 = vpop.xlane.xlu0 %77
      %v79 = vrcp.pop 128.0
      %v80 = vmul.f32 %v76, %v79
      %v81 = vmul.f32 %v78, %v79
      %v82 = vsub.f32 %v73, %v80
      %v83 = vsub.f32 %v74, %v81
      %v84 = vmul.f32 %v82, %v82
      %v85 = vmul.f32 %v83, %v83
      %86 = vadd.xlane.f32.xlu0 %v84
      %v87 = vpop.xlane.xlu0 %86
      %88 = vadd.xlane.f32.xlu0 %v85
      %v89 = vpop.xlane.xlu0 %88
      %v90 = vmul.f32 %v87, %v79
      %v91 = vmul.f32 %v89, %v79
      %v92 = vadd.f32 %v90, 1e-05
      %v93 = vadd.f32 %v91, 1e-05
      %v94 = vrsqrt.pop %v92
      %v95 = vrsqrt.pop %v93
      %v96 = vmul.f32 %v82, %v94
      %v97 = vmul.f32 %v83, %v95
      %v98 = vld [vmem:[%s1] sm:$0x1]
      %v100 = vlaneseq
      %v101 = vshrl.u32 %v100, 7
      %v102 = vsub.s32 0, %v101
      %v103 = vrot.slane %v98, %v102
      %v105 = vmul.f32 %v96, %v103
      %v106 = vmul.f32 %v97, %v103
      %v107 = vld [vmem:[%s2] sm:$0x1]
      %v109 = vlaneseq
      %v110 = vshrl.u32 %v109, 7
      %v111 = vsub.s32 0, %v110
      %v112 = vrot.slane %v107, %v111
      %v114 = vadd.f32 %v105, %v112
      %v115 = vadd.f32 %v106, %v112
      %v116 = vpack.c.bf16 %v115, %v114
      %v118 = vunpack.c.l.b16 %v116
      %v119 = vunpack.c.h.b16 %v116
      %v120 = vpack.c.b16 %v118, %v118
      %v121 = vpack.c.b16 %v119, %v119
      %124 = vst [vmem:[#allocation2] sm:$0xf] %v120
      %125 = vst [vmem:[#allocation2 + $0x4] sm:$0xf] %v121
      %126 = vst [vmem:[#allocation3] sm:$0xff] 0.0
      %127 = vst [vmem:[#allocation3 + $0x8] sm:$0xff] 0.0
    $region45: #{feed_forward.1} parent=1 // pred_fallthru
      _
    %v128 = vld [vmem:[#allocation2] sm:$0xf]
    %v129 = vld [vmem:[#allocation2 + $0x4] sm:$0xf]
    %v130 = vld [vmem:[#allocation7] sm:$0xff]
    %v131 = vld [vmem:[#allocation7 + $0x8] sm:$0xff]
    %v132 = vld [vmem:[#allocation7 + $0x10] sm:$0xff]
    %v133 = vld [vmem:[#allocation7 + $0x18] sm:$0xff]
    %v134 = vld [vmem:[#allocation7 + $0x20] sm:$0xff]
    %v135 = vld [vmem:[#allocation7 + $0x28] sm:$0xff]
    %v136 = vld [vmem:[#allocation7 + $0x30] sm:$0xff]
    %v137 = vld [vmem:[#allocation7 + $0x38] sm:$0xff]
    %v138 = vld [vmem:[#allocation7 + $0x40] sm:$0xff]
    %v139 = vld [vmem:[#allocation7 + $0x48] sm:$0xff]
    %v140 = vld [vmem:[#allocation7 + $0x50] sm:$0xff]
    %v141 = vld [vmem:[#allocation7 + $0x58] sm:$0xff]
    %v142 = vld [vmem:[#allocation7 + $0x60] sm:$0xff]
    %v143 = vld [vmem:[#allocation7 + $0x68] sm:$0xff]
    %v144 = vld [vmem:[#allocation7 + $0x70] sm:$0xff]
    %v145 = vld [vmem:[#allocation7 + $0x78] sm:$0xff]
    %v146 = vld [vmem:[%s4] sm:$0x3]
    %v148 = vlaneseq
    %v149 = vshrl.u32 %v148, 7
    %v150 = vsub.s32 0, %v149
    %v151 = vrot.slane %v146, %v150
    %v152 = vlaneseq
    %v153 = vshrl.u32 %v152, 7
    %v154 = vsub.s32 1, %v153
    %v155 = vrot.slane %v146, %v154
    %v160 = vunpack.c.l.b16 %v128
    %v161 = vunpack.c.l.b16 %v129
    %v162 = vpack.c.b16 %v161, %v160
    %v180 = vunpack.c.l.b16 %v130
    %v181 = vunpack.c.h.b16 %v130
    %v182 = vunpack.c.l.b16 %v131
    %v183 = vunpack.c.h.b16 %v131
    %v184 = vunpack.c.l.b16 %v132
    %v185 = vunpack.c.h.b16 %v132
    %v186 = vunpack.c.l.b16 %v133
    %v187 = vunpack.c.h.b16 %v133
    %v188 = vunpack.c.l.b16 %v134
    %v189 = vunpack.c.h.b16 %v134
    %v190 = vunpack.c.l.b16 %v135
    %v191 = vunpack.c.h.b16 %v135
    %v192 = vunpack.c.l.b16 %v136
    %v193 = vunpack.c.h.b16 %v136
    %v194 = vunpack.c.l.b16 %v137
    %v195 = vunpack.c.h.b16 %v137
    %v196 = vunpack.c.l.b16 %v138
    %v197 = vunpack.c.h.b16 %v138
    %v198 = vunpack.c.l.b16 %v139
    %v199 = vunpack.c.h.b16 %v139
    %v200 = vunpack.c.l.b16 %v140
    %v201 = vunpack.c.h.b16 %v140
    %v202 = vunpack.c.l.b16 %v141
    %v203 = vunpack.c.h.b16 %v141
    %v204 = vunpack.c.l.b16 %v142
    %v205 = vunpack.c.h.b16 %v142
    %v206 = vunpack.c.l.b16 %v143
    %v207 = vunpack.c.h.b16 %v143
    %v208 = vunpack.c.l.b16 %v144
    %v209 = vunpack.c.h.b16 %v144
    %v210 = vunpack.c.l.b16 %v145
    %v211 = vunpack.c.h.b16 %v145
    %v212 = vpack.c.b16 %v182, %v180
    %v213 = vpack.c.b16 %v183, %v181
    %v214 = vpack.c.b16 %v186, %v184
    %v215 = vpack.c.b16 %v187, %v185
    %v216 = vpack.c.b16 %v190, %v188
    %v217 = vpack.c.b16 %v191, %v189
    %v218 = vpack.c.b16 %v194, %v192
    %v219 = vpack.c.b16 %v195, %v193
    %v220 = vpack.c.b16 %v198, %v196
    %v221 = vpack.c.b16 %v199, %v197
    %v222 = vpack.c.b16 %v202, %v200
    %v223 = vpack.c.b16 %v203, %v201
    %v224 = vpack.c.b16 %v206, %v204
    %v225 = vpack.c.b16 %v207, %v205
    %v226 = vpack.c.b16 %v210, %v208
    %v227 = vpack.c.b16 %v211, %v209
    %244 = vmatprep.subr.bf16.mxu0 %v227
    %245 = vmatpush1.bf16.msra.mxu0 %v226
    %246 = vmatprep.subr.bf16.mxu0 %v225
    %247 = vmatpush1.bf16.msra.mxu0 %v224
    %248 = vmatprep.subr.bf16.mxu0 %v223
    %249 = vmatpush1.bf16.msra.mxu0 %v222
    %250 = vmatprep.subr.bf16.mxu0 %v221
    %251 = vmatpush1.bf16.msra.mxu0 %v220
    %252 = vmatprep.subr.bf16.mxu0 %v219
    %253 = vmatpush1.bf16.msra.mxu0 %v218
    %254 = vmatprep.subr.bf16.mxu0 %v217
    %255 = vmatpush1.bf16.msra.mxu0 %v216
    %256 = vmatprep.subr.bf16.mxu0 %v215
    %257 = vmatpush1.bf16.msra.mxu0 %v214
    %258 = vmatprep.subr.bf16.mxu0 %v213
    %259 = vmatpush1.bf16.msra.mxu0 %v212
    %260 = vmatprep.subr.bf16.mxu0 0
    %261 = vmatpush2.bf16.msra.mxu0 0
    %262 = vmatprep.subr.bf16.mxu0 0
    %263 = vmatpush2.bf16.msra.mxu0 0
    %264 = vmatprep.subr.bf16.mxu0 0
    %265 = vmatpush2.bf16.msra.mxu0 0
    %266 = vmatprep.subr.bf16.mxu0 0
    %267 = vmatpush2.bf16.msra.mxu0 0
    %268 = vmatprep.subr.bf16.mxu0 0
    %269 = vmatpush2.bf16.msra.mxu0 0
    %270 = vmatprep.subr.bf16.mxu0 0
    %271 = vmatpush2.bf16.msra.mxu0 0
    %272 = vmatprep.subr.bf16.mxu0 0
    %273 = vmatpush2.bf16.msra.mxu0 0
    %274 = vmatprep.subr.bf16.mxu0 0
    %275 = vmatpush2.bf16.msra.mxu0 0
    %276 = vmatprep.mubr.bf16.mxu0 0
    %277 = vmatmul.mubr.bf16.gmra.mxu0 %v162
    %v278 = vpop.f32.mrf.mxu0
    %v279 = vadd.f32 %v151, %v278
    %v280 = vpop.f32.mrf.mxu0
    %v281 = vadd.f32 %v155, %v280
    %v282 = vpop.f32.mrf.mxu0
    %v283 = vadd.f32 %v151, %v282
    %v284 = vpop.f32.mrf.mxu0
    %v285 = vadd.f32 %v155, %v284
    %286 = vdwg.mxu0
    %v287 = vmul.f32 %v279, 0.5
    %v288 = vmul.f32 %v281, 0.5
    %v289 = vmul.f32 %v283, 0.5
    %v290 = vmul.f32 %v285, 0.5
    %v291 = vmul.f32 %v279, 0.70710677
    %v292 = vmul.f32 %v281, 0.70710677
    %v293 = vmul.f32 %v283, 0.70710677
    %v294 = vmul.f32 %v285, 0.70710677
    %vm295 = vcmp.ge.f32.partialorder %v291, 0.0
    %vm296 = vcmp.ge.f32.partialorder %v292, 0.0
    %vm297 = vcmp.ge.f32.partialorder %v293, 0.0
    %vm298 = vcmp.ge.f32.partialorder %v294, 0.0
    %v299 = vsel %vm295, 1.0, -1.0
    %v300 = vsel %vm296, 1.0, -1.0
    %v301 = vsel %vm297, 1.0, -1.0
    %v302 = vsel %vm298, 1.0, -1.0
    %v303 = vand.u32 2147483647, %v291
    %v304 = vand.u32 2147483647, %v292
    %v305 = vand.u32 2147483647, %v293
    %v306 = vand.u32 2147483647, %v294
    %v307 = vmul.f32 %v303, 0.3275911
    %v308 = vmul.f32 %v304, 0.3275911
    %v309 = vmul.f32 %v305, 0.3275911
    %v310 = vmul.f32 %v306, 0.3275911
    %v311 = vadd.f32 %v307, 1.0
    %v312 = vadd.f32 %v308, 1.0
    %v313 = vadd.f32 %v309, 1.0
    %v314 = vadd.f32 %v310, 1.0
    %v315 = vrcp.pop %v311
    %v316 = vrcp.pop %v312
    %v317 = vrcp.pop %v313
    %v318 = vrcp.pop %v314
    %v319 = vmul.f32 %v315, 1.0614054
    %v320 = vmul.f32 %v316, 1.0614054
    %v321 = vmul.f32 %v317, 1.0614054
    %v322 = vmul.f32 %v318, 1.0614054
    %v323 = vadd.f32 %v319, -1.4531521
    %v324 = vadd.f32 %v320, -1.4531521
    %v325 = vadd.f32 %v321, -1.4531521
    %v326 = vadd.f32 %v322, -1.4531521
    %v327 = vmul.f32 %v323, %v315
    %v328 = vmul.f32 %v324, %v316
    %v329 = vmul.f32 %v325, %v317
    %v330 = vmul.f32 %v326, %v318
    %v331 = vadd.f32 %v327, 1.4214138
    %v332 = vadd.f32 %v328, 1.4214138
    %v333 = vadd.f32 %v329, 1.4214138
    %v334 = vadd.f32 %v330, 1.4214138
    %v335 = vmul.f32 %v331, %v315
    %v336 = vmul.f32 %v332, %v316
    %v337 = vmul.f32 %v333, %v317
    %v338 = vmul.f32 %v334, %v318
    %v339 = vadd.f32 %v335, -0.28449672
    %v340 = vadd.f32 %v336, -0.28449672
    %v341 = vadd.f32 %v337, -0.28449672
    %v342 = vadd.f32 %v338, -0.28449672
    %v343 = vmul.f32 %v339, %v315
    %v344 = vmul.f32 %v340, %v316
    %v345 = vmul.f32 %v341, %v317
    %v346 = vmul.f32 %v342, %v318
    %v347 = vadd.f32 %v343, 0.2548296
    %v348 = vadd.f32 %v344, 0.2548296
    %v349 = vadd.f32 %v345, 0.2548296
    %v350 = vadd.f32 %v346, 0.2548296
    %v351 = vmul.f32 %v347, %v315
    %v352 = vmul.f32 %v348, %v316
    %v353 = vmul.f32 %v349, %v317
    %v354 = vmul.f32 %v350, %v318
    %v355 = vsub.f32 0.0, %v303
    %v356 = vsub.f32 0.0, %v304
    %v357 = vsub.f32 0.0, %v305
    %v358 = vsub.f32 0.0, %v306
    %v359 = vmul.f32 %v355, %v303
    %v360 = vmul.f32 %v356, %v304
    %v361 = vmul.f32 %v357, %v305
    %v362 = vmul.f32 %v358, %v306
    %v363 = vmul.f32 %v359, 1.442695
    %v364 = vpow.pop %v363
    %v365 = vmul.f32 %v360, 1.442695
    %v366 = vpow.pop %v365
    %v367 = vmul.f32 %v361, 1.442695
    %v368 = vpow.pop %v367
    %v369 = vmul.f32 %v362, 1.442695
    %v370 = vpow.pop %v369
    %v371 = vmul.f32 %v351, %v364
    %v372 = vmul.f32 %v352, %v366
    %v373 = vmul.f32 %v353, %v368
    %v374 = vmul.f32 %v354, %v370
    %v375 = vsub.f32 1.0, %v371
    %v376 = vsub.f32 1.0, %v372
    %v377 = vsub.f32 1.0, %v373
    %v378 = vsub.f32 1.0, %v374
    %v379 = vmul.f32 %v299, %v375
    %v380 = vmul.f32 %v300, %v376
    %v381 = vmul.f32 %v301, %v377
    %v382 = vmul.f32 %v302, %v378
    %v383 = vadd.f32 %v379, 1.0
    %v384 = vadd.f32 %v380, 1.0
    %v385 = vadd.f32 %v381, 1.0
    %v386 = vadd.f32 %v382, 1.0
    %v387 = vmul.f32 %v287, %v383
    %v388 = vmul.f32 %v288, %v384
    %v389 = vmul.f32 %v289, %v385
    %v390 = vmul.f32 %v290, %v386
    %v391 = vld [vmem:[#allocation9] sm:$0xf]
    %v392 = vld [vmem:[#allocation9 + $0x4] sm:$0xf]
    %v393 = vld [vmem:[#allocation9 + $0x8] sm:$0xf]
    %v394 = vld [vmem:[#allocation9 + $0xc] sm:$0xf]
    %v395 = vld [vmem:[#allocation9 + $0x10] sm:$0xf]
    %v396 = vld [vmem:[#allocation9 + $0x14] sm:$0xf]
    %v397 = vld [vmem:[#allocation9 + $0x18] sm:$0xf]
    %v398 = vld [vmem:[#allocation9 + $0x1c] sm:$0xf]
    %v399 = vld [vmem:[#allocation9 + $0x20] sm:$0xf]
    %v400 = vld [vmem:[#allocation9 + $0x24] sm:$0xf]
    %v401 = vld [vmem:[#allocation9 + $0x28] sm:$0xf]
    %v402 = vld [vmem:[#allocation9 + $0x2c] sm:$0xf]
    %v403 = vld [vmem:[#allocation9 + $0x30] sm:$0xf]
    %v404 = vld [vmem:[#allocation9 + $0x34] sm:$0xf]
    %v405 = vld [vmem:[#allocation9 + $0x38] sm:$0xf]
    %v406 = vld [vmem:[#allocation9 + $0x3c] sm:$0xf]
    %v407 = vld [vmem:[#allocation9 + $0x40] sm:$0xf]
    %v408 = vld [vmem:[#allocation9 + $0x44] sm:$0xf]
    %v409 = vld [vmem:[#allocation9 + $0x48] sm:$0xf]
    %v410 = vld [vmem:[#allocation9 + $0x4c] sm:$0xf]
    %v411 = vld [vmem:[#allocation9 + $0x50] sm:$0xf]
    %v412 = vld [vmem:[#allocation9 + $0x54] sm:$0xf]
    %v413 = vld [vmem:[#allocation9 + $0x58] sm:$0xf]
    %v414 = vld [vmem:[#allocation9 + $0x5c] sm:$0xf]
    %v415 = vld [vmem:[#allocation9 + $0x60] sm:$0xf]
    %v416 = vld [vmem:[#allocation9 + $0x64] sm:$0xf]
    %v417 = vld [vmem:[#allocation9 + $0x68] sm:$0xf]
    %v418 = vld [vmem:[#allocation9 + $0x6c] sm:$0xf]
    %v419 = vld [vmem:[#allocation9 + $0x70] sm:$0xf]
    %v420 = vld [vmem:[#allocation9 + $0x74] sm:$0xf]
    %v421 = vld [vmem:[#allocation9 + $0x78] sm:$0xf]
    %v422 = vld [vmem:[#allocation9 + $0x7c] sm:$0xf]
    %v423 = vld [vmem:[#allocation3] sm:$0xff]
    %v424 = vld [vmem:[#allocation3 + $0x8] sm:$0xff]
    %v425 = vpack.c.bf16 %v389, %v387
    %v426 = vpack.c.bf16 %v390, %v388
    %v459 = vunpack.c.l.b16 %v391
    %v460 = vunpack.c.l.b16 %v392
    %v461 = vunpack.c.l.b16 %v393
    %v462 = vunpack.c.l.b16 %v394
    %v463 = vunpack.c.l.b16 %v395
    %v464 = vunpack.c.l.b16 %v396
    %v465 = vunpack.c.l.b16 %v397
    %v466 = vunpack.c.l.b16 %v398
    %v467 = vunpack.c.l.b16 %v399
    %v468 = vunpack.c.l.b16 %v400
    %v469 = vunpack.c.l.b16 %v401
    %v470 = vunpack.c.l.b16 %v402
    %v471 = vunpack.c.l.b16 %v403
    %v472 = vunpack.c.l.b16 %v404
    %v473 = vunpack.c.l.b16 %v405
    %v474 = vunpack.c.l.b16 %v406
    %v475 = vunpack.c.l.b16 %v407
    %v476 = vunpack.c.l.b16 %v408
    %v477 = vunpack.c.l.b16 %v409
    %v478 = vunpack.c.l.b16 %v410
    %v479 = vunpack.c.l.b16 %v411
    %v480 = vunpack.c.l.b16 %v412
    %v481 = vunpack.c.l.b16 %v413
    %v482 = vunpack.c.l.b16 %v414
    %v483 = vunpack.c.l.b16 %v415
    %v484 = vunpack.c.l.b16 %v416
    %v485 = vunpack.c.l.b16 %v417
    %v486 = vunpack.c.l.b16 %v418
    %v487 = vunpack.c.l.b16 %v419
    %v488 = vunpack.c.l.b16 %v420
    %v489 = vunpack.c.l.b16 %v421
    %v490 = vunpack.c.l.b16 %v422
    %v491 = vpack.c.b16 %v460, %v459
    %v492 = vpack.c.b16 %v462, %v461
    %v493 = vpack.c.b16 %v464, %v463
    %v494 = vpack.c.b16 %v466, %v465
    %v495 = vpack.c.b16 %v468, %v467
    %v496 = vpack.c.b16 %v470, %v469
    %v497 = vpack.c.b16 %v472, %v471
    %v498 = vpack.c.b16 %v474, %v473
    %v499 = vpack.c.b16 %v476, %v475
    %v500 = vpack.c.b16 %v478, %v477
    %v501 = vpack.c.b16 %v480, %v479
    %v502 = vpack.c.b16 %v482, %v481
    %v503 = vpack.c.b16 %v484, %v483
    %v504 = vpack.c.b16 %v486, %v485
    %v505 = vpack.c.b16 %v488, %v487
    %v506 = vpack.c.b16 %v490, %v489
    %523 = vmatprep.subr.bf16.mxu0 0
    %524 = vmatpush1.bf16.msra.mxu0 %v498
    %525 = vmatprep.subr.bf16.mxu0 0
    %526 = vmatpush1.bf16.msra.mxu0 %v497
    %527 = vmatprep.subr.bf16.mxu0 0
    %528 = vmatpush1.bf16.msra.mxu0 %v496
    %529 = vmatprep.subr.bf16.mxu0 0
    %530 = vmatpush1.bf16.msra.mxu0 %v495
    %531 = vmatprep.subr.bf16.mxu0 0
    %532 = vmatpush1.bf16.msra.mxu0 %v494
    %533 = vmatprep.subr.bf16.mxu0 0
    %534 = vmatpush1.bf16.msra.mxu0 %v493
    %535 = vmatprep.subr.bf16.mxu0 0
    %536 = vmatpush1.bf16.msra.mxu0 %v492
    %537 = vmatprep.subr.bf16.mxu0 0
    %538 = vmatpush1.bf16.msra.mxu0 %v491
    %539 = vmatprep.subr.bf16.mxu0 0
    %540 = vmatpush2.bf16.msra.mxu0 %v506
    %541 = vmatprep.subr.bf16.mxu0 0
    %542 = vmatpush2.bf16.msra.mxu0 %v505
    %543 = vmatprep.subr.bf16.mxu0 0
    %544 = vmatpush2.bf16.msra.mxu0 %v504
    %545 = vmatprep.subr.bf16.mxu0 0
    %546 = vmatpush2.bf16.msra.mxu0 %v503
    %547 = vmatprep.subr.bf16.mxu0 0
    %548 = vmatpush2.bf16.msra.mxu0 %v502
    %549 = vmatprep.subr.bf16.mxu0 0
    %550 = vmatpush2.bf16.msra.mxu0 %v501
    %551 = vmatprep.subr.bf16.mxu0 0
    %552 = vmatpush2.bf16.msra.mxu0 %v500
    %553 = vmatprep.subr.bf16.mxu0 0
    %554 = vmatpush2.bf16.msra.mxu0 %v499
    %555 = vmatprep.mubr.bf16.mxu0 %v426
    %556 = vmatmul.mubr.bf16.gmra.mxu0 %v425
    %v557 = vpop.f32.mrf.mxu0
    %v558 = vadd.f32 0.0, %v557
    %v559 = vpop.f32.mrf.mxu0
    %v560 = vpop.f32.mrf.mxu0
    %v561 = vadd.f32 0.0, %v560
    %v562 = vpop.f32.mrf.mxu0
    %563 = vdwg.mxu0
    %v564 = vadd.f32 %v423, %v558
    %v565 = vadd.f32 %v424, %v561
    %566 = vst [vmem:[#allocation3] sm:$0xff] %v564
    %567 = vst [vmem:[#allocation3 + $0x8] sm:$0xff] %v565
    // Predicated region
    $region46: #{feed_forward.1} parent=1 // pred_check
      %p568 = pneg %p69
    $region47: #{feed_forward.1} parent=1 // pred_check_branch
      %570 = sbr.rel (%p568) target = $region49
    $region48: #{feed_forward.1} parent=1 // pred_region
      %v571 = vld [vmem:[#allocation3] sm:$0xff]
      %v572 = vld [vmem:[#allocation3 + $0x8] sm:$0xff]
      %v573 = vld [vmem:[%s6] sm:$0x1]
      %v575 = vlaneseq
      %v576 = vshrl.u32 %v575, 7
      %v577 = vsub.s32 0, %v576
      %v578 = vrot.slane %v573, %v577
      %v580 = vadd.f32 %v571, %v578
      %v581 = vadd.f32 %v572, %v578
      %582 = vst [vmem:[#allocation10] sm:$0xff] %v580
      %583 = vst [vmem:[#allocation10 + $0x8] sm:$0xff] %v581
    $region49: #{feed_forward.1} parent=1 // pred_fallthru
      _
    // Predicated region
    $region50: #{feed_forward.1} parent=1 // pred_check
      _
    $region51: #{feed_forward.1} parent=1 // pred_check_branch
      %585 = sbr.rel (0) target = $region53
    $region52: #{feed_forward.1} parent=1 // pred_region
      %s587 = ssub.s32 256, 256
      %588 = vsyncadd [#allocation6], %s587
      %s589 = sshll.u32 [#allocation10], 4
      %s590 = int_to_ptr.vmem [resolvable:$true] %s589
      %595 = dma.vmem_to_hbm [thread:$0]  %s590, 256, %s7, [#allocation6], 128, 128, 8
    $region53: #{feed_forward.1} parent=1 // pred_fallthru
      _
    // Predicated region
    $region54: #{feed_forward.1} parent=1 // pred_check
      _
    $region55: #{feed_forward.1} parent=1 // pred_check_branch
      %597 = sbr.rel (0) target = $region57
    $region56: #{feed_forward.1} parent=1 // pred_region
      %598 = dma.done [#allocation6], 256
    $region57: #{feed_forward.1} parent=1 // pred_fallthru
      _
    %599 = vsyncpa [#allocation5], 1
    %600 = vsyncpa [#allocation8], 1
    %601 = vsyncpa [#allocation6], 1

</llo_original>
